<compile_context>
chip_gen: v7x
topology: tpu7x:2x2x1
jax: 0.10.0
libtpu: 0.0.40
codegen_flags: <defaults>
</compile_context>

<pallas_src>
import functools
import math

import jax
import jax.numpy as jnp
from jax.experimental import pallas as pl
from jax.experimental.pallas import tpu as pltpu


def _round_up(v, m):
    return ((v + m - 1) // m) * m


def _vmem_budget_bytes():
    """~75% of per-core VMEM: ~48 MiB on v7x (64 MiB), ~96 MiB on v5e/v6e."""
    cap = 64 * 1024 * 1024  # conservative default: v7x per-TensorCore VMEM
    try:
        info = pltpu.get_tpu_info()
        cap = int(getattr(info, "vmem_capacity_bytes", cap) or cap)
    except Exception:
        pass  # keep the conservative default
    return (3 * cap) // 4


def _choose_tiles(n, in_p, out_p, adj_isz, x_isz, budget, tm_req=None, tk_req=None):
    """Pick (tm, tk) so the per-step, per-core VMEM footprint fits `budget`.

    Footprint (double-buffered pipeline stages counted explicitly once):
      adj tile : 2 * tm * tk * adj_isz        x tile : 2 * tk * in_p * x_isz
      W^T      : 2 * in_p * out_p * x_isz     bias   : 2 * out_p * 4
      out tile : 2 * tm * out_p * 4           h acc  : tm * in_p * 4 (scratch)
    """
    def fixed_bytes(tm):
        return (2 * in_p * out_p * x_isz + 2 * out_p * 4
                + 2 * tm * out_p * 4 + tm * in_p * 4)

    def tk_for(tm):
        per_col = 2 * tm * adj_isz + 2 * in_p * x_isz
        avail = budget - fixed_bytes(tm)
        if avail <= per_col * min(n, 128):
            return None
        cap = avail // per_col
        if cap >= n:
            return n                              # single K step: x fetched once
        return max(128, int(cap // 128) * 128)    # MXU / lane aligned K tile

    if tm_req is not None:
        r = _round_up(tm_req, 8)
        tm = n if r >= n else r                   # tm==n uses the full-dim exemption
    else:
        # Powers of two strictly < n => >=2 row tiles whenever N allows (megacore).
        cands = [t for t in (2048, 1024, 512, 256, 128, 64, 32, 16, 8) if t < n] or [n]
        tm = next((t for t in cands if tk_for(t) is not None), cands[-1])

    if tk_req is not None:
        tk = n if tk_req >= n else min(n, _round_up(tk_req, 128))
    else:
        tk = tk_for(tm) or min(n, 128)
    return tm, tk


def _gcn_kernel(adj_ref, x_ref, wt_ref, b_ref, o_ref, acc_ref, *,
                n, tk, compute_dtype, mask_k):
    # adj_ref: [tm, tk]     adjacency tile (input dtype; cast to bf16 here)
    # x_ref:   [tk, in_p]   feature tile (compute dtype, lane-padded)
    # wt_ref:  [in_p, out_p] pre-transposed, zero-padded weight (resident)
    # b_ref:   [1, out_p]   zero-padded f32 bias (resident)
    # o_ref:   [tm, out_p]  lane-dense f32 output row tile (written once)
    # acc_ref: [tm, in_p]   f32 accumulator for h = adj @ x
    k = pl.program_id(1)

    @pl.when(k == 0)
    def _():
        acc_ref[...] = jnp.zeros_like(acc_ref)

    adj_blk = adj_ref[...].astype(compute_dtype)
    x_blk = x_ref[...].astype(compute_dtype)
    if mask_k:
        # Last contraction tile runs past N: out-of-bounds block data is garbage,
        # so zero both operands (0 * garbage could still be NaN/Inf).
        cols = k * tk + jax.lax.broadcasted_iota(jnp.int32, adj_blk.shape, 1)
        adj_blk = jnp.where(cols < n, adj_blk, jnp.zeros_like(adj_blk))
        rows = k * tk + jax.lax.broadcasted_iota(jnp.int32, x_blk.shape, 0)
        x_blk = jnp.where(rows < n, x_blk, jnp.zeros_like(x_blk))

    acc_ref[...] += jnp.dot(adj_blk, x_blk, preferred_element_type=jnp.float32)

    @pl.when(k == pl.num_programs(1) - 1)
    def _():
        h = acc_ref[...].astype(compute_dtype)
        o_ref[...] = (jnp.dot(h, wt_ref[...], preferred_element_type=jnp.float32)
                      + b_ref[...]).astype(o_ref.dtype)


def gcn_forward(x, adj, w, b, *, compute_dtype=jnp.bfloat16,
                tm=None, tk=None, vmem_budget_bytes=None):
    """GCN forward: (adj @ x) @ w.T + b.

    x: [N, in_dim], adj: [N, N] (any float dtype; pass bf16 to halve the
    dominant HBM stream), w: [out_dim, in_dim] (PyTorch Linear layout),
    b: [out_dim].  Returns [N, out_dim] float32.
    """
    n, in_dim = x.shape
    out_dim = w.shape[0]
    assert adj.shape == (n, n)

    in_p = _round_up(in_dim, 128)
    out_p = _round_up(out_dim, 128)

    # Small O(N*D)/O(D*D) operands: lane-pad + cast in the wrapper (cheap).
    # adj (the O(N^2) operand) is deliberately untouched: no pad, no wrapper
    # cast, so the kernel streams it from HBM exactly once.
    x_p = x.astype(compute_dtype)
    if in_p != in_dim:
        x_p = jnp.zeros((n, in_p), compute_dtype).at[:, :in_dim].set(x_p)
    wt_p = jnp.zeros((in_p, out_p), compute_dtype).at[:in_dim, :out_dim].set(
        w.T.astype(compute_dtype))
    b_p = jnp.zeros((1, out_p), jnp.float32).at[0, :out_dim].set(
        b.astype(jnp.float32))

    budget = int(vmem_budget_bytes) if vmem_budget_bytes else _vmem_budget_bytes()
    adj_isz = jnp.dtype(adj.dtype).itemsize
    x_isz = jnp.dtype(compute_dtype).itemsize
    tm_eff, tk_eff = _choose_tiles(n, in_p, out_p, adj_isz, x_isz, budget,
                                   tm_req=tm, tk_req=tk)
    mask_k = (n % tk_eff) != 0

    grid = (pl.cdiv(n, tm_eff), pl.cdiv(n, tk_eff))  # reduction axis last
    kernel = functools.partial(_gcn_kernel, n=n, tk=tk_eff,
                               compute_dtype=compute_dtype, mask_k=mask_k)

    # NOTE: resident W^T / bias are tiny and x must be double-buffered when the
    # contraction is tiled, so pl.Buffered(1) would buy almost nothing here.
    out_padded = pl.pallas_call(
        kernel,
        out_shape=jax.ShapeDtypeStruct((n, out_p), jnp.float32),
        grid_spec=pltpu.PrefetchScalarGridSpec(
            num_scalar_prefetch=0,
            grid=grid,
            in_specs=[
                pl.BlockSpec((tm_eff, tk_eff), lambda i, k: (i, k)),   # adj tile
                pl.BlockSpec((tk_eff, in_p), lambda i, k: (k, 0)),     # x tile
                pl.BlockSpec((in_p, out_p), lambda i, k: (0, 0)),      # W^T (resident)
                pl.BlockSpec((1, out_p), lambda i, k: (0, 0)),         # bias (resident)
            ],
            out_specs=pl.BlockSpec((tm_eff, out_p), lambda i, k: (i, 0)),
            scratch_shapes=[pltpu.VMEM((tm_eff, in_p), jnp.float32)],
        ),
        compiler_params=pltpu.CompilerParams(
            dimension_semantics=("parallel", "arbitrary"),
            vmem_limit_bytes=budget,
        ),
    )(adj, x_p, wt_p, b_p)

    return out_padded[:, :out_dim]


def gcn_reference(x, adj, w, b, compute_dtype=jnp.bfloat16):
    """Matched-precision reference: bf16 operands, f32 accumulation."""
    cd = compute_dtype
    h = jnp.dot(adj.astype(cd), x.astype(cd), preferred_element_type=jnp.float32)
    h = jnp.dot(h.astype(cd), w.T.astype(cd), preferred_element_type=jnp.float32)
    return h + b.astype(jnp.float32)


def init_gcn_params(key, in_dim, out_dim):
    """Deterministic parameter init mirroring the PyTorch module __init__."""
    k_w, k_b = jax.random.split(key)
    std = math.sqrt(2.0 / (in_dim + out_dim))            # xavier_normal_
    w = std * jax.random.normal(k_w, (out_dim, in_dim), dtype=jnp.float32)
    bound = 1.0 / math.sqrt(in_dim)                      # nn.Linear bias default
    b = jax.random.uniform(k_b, (out_dim,), minval=-bound, maxval=bound,
                           dtype=jnp.float32)
    return w, b


if __name__ == "__main__":
    key = jax.random.PRNGKey(0)
    k_x, k_adj, k_p, k_x2, k_adj2, k_p2 = jax.random.split(key, 6)

    # Small shapes implied by the module: N nodes, in_dim -> out_dim features.
    N, IN_DIM, OUT_DIM = 8, 32, 16
    x = jax.random.normal(k_x, (N, IN_DIM), dtype=jnp.float32)
    adj = jax.random.uniform(k_adj, (N, N), dtype=jnp.float32)
    w, b = init_gcn_params(k_p, IN_DIM, OUT_DIM)

    out = jax.block_until_ready(gcn_forward(x, adj, w, b))
    ref = gcn_reference(x, adj, w, b)
    ref_f32 = (adj @ x) @ w.T + b
    assert out.shape == (N, OUT_DIM)
    assert jnp.allclose(out, ref, atol=5e-2, rtol=2e-2)      # matched bf16 math
    assert jnp.allclose(out, ref_f32, atol=1e-1, rtol=5e-2)  # vs full-f32 math

    # adj already stored as bf16: halves the dominant HBM stream, same result.
    out_b = jax.block_until_ready(gcn_forward(x, adj.astype(jnp.bfloat16), w, b))
    assert jnp.allclose(out_b, ref, atol=5e-2, rtol=2e-2)

    # Non-aligned N: ragged last row tile; contraction stays a single K step
    # (x effectively resident) because it easily fits the VMEM budget.
    N2, IN2, OUT2 = 200, 48, 20
    x2 = jax.random.normal(k_x2, (N2, IN2), dtype=jnp.float32)
    adj2 = jax.random.uniform(k_adj2, (N2, N2), dtype=jnp.float32)
    w2, b2 = init_gcn_params(k_p2, IN2, OUT2)
    ref2 = gcn_reference(x2, adj2, w2, b2)

    out2 = jax.block_until_ready(gcn_forward(x2, adj2, w2, b2))
    assert out2.shape == (N2, OUT2)
    assert jnp.allclose(out2, ref2, atol=5e-2, rtol=2e-2)

    # Force tk < N to exercise the K-axis accumulator + ragged-K masking path
    # (the path very large graphs take when x / the adj row strip exceed VMEM).
    out3 = jax.block_until_ready(gcn_forward(x2, adj2, w2, b2, tk=128))
    assert jnp.allclose(out3, ref2, atol=5e-2, rtol=2e-2)

    print("KERNEL_OK")
</pallas_src>

<mosaic_0001>
module attributes {stable_mosaic.version = 11 : i64} {
  func.func @_gcn_kernel(%arg0: i32, %arg1: i32, %arg2: memref<8x8xf32, #tpu.memory_space<vmem>>, %arg3: memref<8x128xbf16, #tpu.memory_space<vmem>>, %arg4: memref<128x128xbf16, #tpu.memory_space<vmem>>, %arg5: memref<1x128xf32, #tpu.memory_space<vmem>>, %arg6: memref<8x128xf32, #tpu.memory_space<vmem>>, %arg7: memref<8x128xf32, #tpu.memory_space<vmem>>) attributes {dimension_semantics = [#tpu.dimension_semantics<parallel>, #tpu.dimension_semantics<arbitrary>], iteration_bounds = array<i64: 1, 1>, scalar_prefetch = 0 : i64, scratch_operands = 1 : i64, tpu.core_type = #tpu.core_type<tc>, window_params = [{transform_indices = @transform_0, window_bounds = array<i64: 8, 8>}, {transform_indices = @transform_1, window_bounds = array<i64: 8, 128>}, {pipeline_mode = #tpu.pipeline_mode<synchronous>, transform_indices = @transform_2, window_bounds = array<i64: 128, 128>}, {pipeline_mode = #tpu.pipeline_mode<synchronous>, transform_indices = @transform_3, window_bounds = array<i64: 1, 128>}, {transform_indices = @transform_4, window_bounds = array<i64: 8, 128>}]} {
    %c0_i32 = arith.constant 0 : i32
    %0 = arith.cmpi eq, %arg1, %c0_i32 : i32
    %1 = arith.extui %0 : i1 to i32
    %c0_i32_0 = arith.constant 0 : i32
    %2 = arith.cmpi ne, %1, %c0_i32_0 : i32
    scf.if %2 {
      %cst_10 = arith.constant 0.000000e+00 : f32
      %13 = vector.broadcast %cst_10 : f32 to vector<8x128xf32>
      %c0_11 = arith.constant 0 : index
      %c0_12 = arith.constant 0 : index
      %14 = vector.load %arg7[%c0_11, %c0_12] : memref<8x128xf32, #tpu.memory_space<vmem>>, vector<8x128xf32>
      tpu.vector_store %arg7[%c0_11, %c0_12], %13 {strides = array<i32>} : memref<8x128xf32, #tpu.memory_space<vmem>>, vector<8x128xf32>,
    } else {
    }
    %c0 = arith.constant 0 : index
    %c0_1 = arith.constant 0 : index
    %3 = vector.load %arg2[%c0, %c0_1] : memref<8x8xf32, #tpu.memory_space<vmem>>, vector<8x8xf32>
    %4 = arith.truncf %3 : vector<8x8xf32> to vector<8x8xbf16>
    %c0_2 = arith.constant 0 : index
    %c0_3 = arith.constant 0 : index
    %5 = vector.load %arg3[%c0_2, %c0_3] : memref<8x128xbf16, #tpu.memory_space<vmem>>, vector<8x128xbf16>
    %c0_4 = arith.constant 0 : index
    %c0_5 = arith.constant 0 : index
    %6 = vector.load %arg7[%c0_4, %c0_5] : memref<8x128xf32, #tpu.memory_space<vmem>>, vector<8x128xf32>
    %cst = arith.constant dense<0.000000e+00> : vector<8x128xf32>
    %7 = tpu.matmul %4, %5, %cst {dimension_numbers = #tpu.dot_dimension_numbers<[1], [0], [0], [1], [0, 0, 1, 1], [], []>} : vector<8x8xbf16>, vector<8x128xbf16>, vector<8x128xf32> -> vector<8x128xf32>
    %8 = arith.addf %6, %7 : vector<8x128xf32>
    %c0_6 = arith.constant 0 : index
    %c0_7 = arith.constant 0 : index
    %9 = vector.load %arg7[%c0_6, %c0_7] : memref<8x128xf32, #tpu.memory_space<vmem>>, vector<8x128xf32>
    tpu.vector_store %arg7[%c0_6, %c0_7], %8 {strides = array<i32>} : memref<8x128xf32, #tpu.memory_space<vmem>>, vector<8x128xf32>,
    %c0_i32_8 = arith.constant 0 : i32
    %10 = arith.cmpi eq, %arg1, %c0_i32_8 : i32
    %11 = arith.extui %10 : i1 to i32
    %c0_i32_9 = arith.constant 0 : i32
    %12 = arith.cmpi ne, %11, %c0_i32_9 : i32
    scf.if %12 {
      %c0_10 = arith.constant 0 : index
      %c0_11 = arith.constant 0 : index
      %13 = vector.load %arg7[%c0_10, %c0_11] : memref<8x128xf32, #tpu.memory_space<vmem>>, vector<8x128xf32>
      %14 = arith.truncf %13 : vector<8x128xf32> to vector<8x128xbf16>
      %c0_12 = arith.constant 0 : index
      %c0_13 = arith.constant 0 : index
      %15 = vector.load %arg4[%c0_12, %c0_13] : memref<128x128xbf16, #tpu.memory_space<vmem>>, vector<128x128xbf16>
      %cst_14 = arith.constant dense<0.000000e+00> : vector<8x128xf32>
      %16 = tpu.matmul %14, %15, %cst_14 {dimension_numbers = #tpu.dot_dimension_numbers<[1], [0], [0], [1], [0, 0, 1, 1], [], []>} : vector<8x128xbf16>, vector<128x128xbf16>, vector<8x128xf32> -> vector<8x128xf32>
      %c0_15 = arith.constant 0 : index
      %c0_16 = arith.constant 0 : index
      %17 = vector.load %arg5[%c0_15, %c0_16] : memref<1x128xf32, #tpu.memory_space<vmem>>, vector<1x128xf32>
      %18 = vector.broadcast %17 : vector<1x128xf32> to vector<8x128xf32>
      %19 = arith.addf %16, %18 : vector<8x128xf32>
      %c0_17 = arith.constant 0 : index
      %c0_18 = arith.constant 0 : index
      %20 = vector.load %arg6[%c0_17, %c0_18] : memref<8x128xf32, #tpu.memory_space<vmem>>, vector<8x128xf32>
      tpu.vector_store %arg6[%c0_17, %c0_18], %19 {strides = array<i32>} : memref<8x128xf32, #tpu.memory_space<vmem>>, vector<8x128xf32>,
    } else {
    }
    return
  }
  func.func @transform_0(%arg0: i32, %arg1: i32) -> (i32, i32) {
    %c0_i32 = arith.constant 0 : i32
    return %arg0, %arg1 : i32, i32
  }
  func.func @transform_1(%arg0: i32, %arg1: i32) -> (i32, i32) {
    %c0_i32 = arith.constant 0 : i32
    %c0_i32_0 = arith.constant 0 : i32
    return %arg1, %c0_i32 : i32, i32
  }
  func.func @transform_2(%arg0: i32, %arg1: i32) -> (i32, i32) {
    %c0_i32 = arith.constant 0 : i32
    %c0_i32_0 = arith.constant 0 : i32
    %c0_i32_1 = arith.constant 0 : i32
    return %c0_i32, %c0_i32_0 : i32, i32
  }
  func.func @transform_3(%arg0: i32, %arg1: i32) -> (i32, i32) {
    %c0_i32 = arith.constant 0 : i32
    %c0_i32_0 = arith.constant 0 : i32
    %c0_i32_1 = arith.constant 0 : i32
    return %c0_i32, %c0_i32_0 : i32, i32
  }
  func.func @transform_4(%arg0: i32, %arg1: i32) -> (i32, i32) {
    %c0_i32 = arith.constant 0 : i32
    %c0_i32_0 = arith.constant 0 : i32
    return %arg0, %c0_i32 : i32, i32
  }
}

</mosaic_0001>

<llo_original>
// kernel: tpu_custom_call.1
$region0: #{tpu_custom_call.1}
  #allocation0 [shape = 'u32[]', space=smem, size = 0x4, offset = 0x4, fixed_abs, tag = 'smem constant byte address 0x4 - core index']
  #allocation1 [shape = 'u32[144,128]{1,0:T(1,128)}', space=vmem, size = 0x12000, scoped, tag = 'internal scratch']
  #allocation2 [shape = 'f32[8,128]{1,0:T(8,128)}', space=vmem, size = 0x1000, scoped, tag = 'scratch operand']
  %s0 = inlined_call_operand.hbm [shape: f32[8,8], index: 0, kind: input, shape index: {}]
  %s1 = inlined_call_operand.hbm [shape: bf16[8,128], index: 1, kind: input, shape index: {}]
  %s2 = inlined_call_operand.hbm [shape: bf16[128,128], index: 2, kind: input, shape index: {}]
  %s3 = inlined_call_operand.vmem [shape: f32[1,128], index: 3, kind: input, shape index: {}]
  %s4 = inlined_call_operand.hbm [shape: f32[8,128], index: 4, kind: output, shape index: {}]
  %s5 = sld [smem:[#allocation0]]
  $region46: #{tpu_custom_call.1} parent=0
    _
  %s7 = ssub.s32 1, %s5
  %s8 = scalar_select 0, %s7, %s5
  $region1: #{tpu_custom_call.1} parent=0
    #allocation3 [shape = 'u8[4096]{0}', space=vmem, size = 0x1000, scoped, tag = 'input window, operand 0, single buffered']
    #allocation4 [shape = 's32[1]{0}', space=sflag, size = 0x4, scoped, tag = 'scoped memory for tpu_custom_call.1']
    #allocation5 [shape = 's32[1]{0}', space=sflag, size = 0x4, scoped, tag = 'scoped memory for tpu_custom_call.1']
    #allocation6 [shape = 'u8[2048]{0}', space=vmem, size = 0x800, scoped, tag = 'input window, operand 1, single buffered']
    #allocation7 [shape = 's32[1]{0}', space=sflag, size = 0x4, scoped, tag = 'scoped memory for tpu_custom_call.1']
    #allocation8 [shape = 'u8[32768]{0}', space=vmem, size = 0x8000, scoped, tag = 'input window, operand 2, single buffered']
    #allocation9 [shape = 'u8[4096]{0}', space=vmem, size = 0x1000, scoped, tag = 'output window, operand 0, single buffered']
    %9 = vsyncpa [#allocation4], 0
    %10 = vsyncpa [#allocation7], 0
    %11 = vsyncpa [#allocation5], 0
    // Predicated region
    $region2: #{tpu_custom_call.1} parent=1 // pred_check
      _
    $region3: #{tpu_custom_call.1} parent=1 // pred_check_branch
      %13 = sbr.rel (0) target = $region5
    $region4: #{tpu_custom_call.1} parent=1 // pred_region
      %s15 = ssub.s32 128, 128
      %16 = vsyncadd [#allocation4], %s15
      %s18 = sshll.u32 [#allocation3], 4
      %s19 = int_to_ptr.vmem [resolvable:$true] %s18
      %21 = dma.hbm_to_vmem [thread:$0]  %s0, 128, %s19, [#allocation4]
    $region5: #{tpu_custom_call.1} parent=1 // pred_fallthru
      _
    // Predicated region
    $region6: #{tpu_custom_call.1} parent=1 // pred_check
      _
    $region7: #{tpu_custom_call.1} parent=1 // pred_check_branch
      %23 = sbr.rel (0) target = $region9
    $region8: #{tpu_custom_call.1} parent=1 // pred_region
      %s25 = ssub.s32 64, 64
      %26 = vsyncadd [#allocation7], %s25
      %s28 = sshll.u32 [#allocation6], 4
      %s29 = int_to_ptr.vmem [resolvable:$true] %s28
      %31 = dma.hbm_to_vmem [thread:$0]  %s1, 64, %s29, [#allocation7]
    $region9: #{tpu_custom_call.1} parent=1 // pred_fallthru
      _
    // Predicated region
    $region10: #{tpu_custom_call.1} parent=1 // pred_check
      _
    $region11: #{tpu_custom_call.1} parent=1 // pred_check_branch
      %33 = sbr.rel (0) target = $region13
    $region12: #{tpu_custom_call.1} parent=1 // pred_region
      %s35 = ssub.s32 1024, 1024
      %36 = vsyncadd [#allocation7], %s35
      %s37 = sshll.u32 [#allocation8], 4
      %s38 = int_to_ptr.vmem [resolvable:$true] %s37
      %43 = dma.hbm_to_vmem [thread:$0]  %s2, 1024, %s38, [#allocation7], 64, 64, 4
    $region13: #{tpu_custom_call.1} parent=1 // pred_fallthru
      _
    // Predicated region
    $region14: #{tpu_custom_call.1} parent=1 // pred_check
      _
    $region15: #{tpu_custom_call.1} parent=1 // pred_check_branch
      %45 = sbr.rel (0) target = $region17
    $region16: #{tpu_custom_call.1} parent=1 // pred_region
      _
    $region17: #{tpu_custom_call.1} parent=1 // pred_fallthru
      _
    // Predicated region
    $region18: #{tpu_custom_call.1} parent=1 // pred_check
      _
    $region19: #{tpu_custom_call.1} parent=1 // pred_check_branch
      %47 = sbr.rel (0) target = $region21
    $region20: #{tpu_custom_call.1} parent=1 // pred_region
      %48 = dma.done [#allocation4], 128
    $region21: #{tpu_custom_call.1} parent=1 // pred_fallthru
      _
    // Predicated region
    $region22: #{tpu_custom_call.1} parent=1 // pred_check
      _
    $region23: #{tpu_custom_call.1} parent=1 // pred_check_branch
      %50 = sbr.rel (0) target = $region25
    $region24: #{tpu_custom_call.1} parent=1 // pred_region
      %51 = dma.done [#allocation7], 64
    $region25: #{tpu_custom_call.1} parent=1 // pred_fallthru
      _
    // Predicated region
    $region26: #{tpu_custom_call.1} parent=1 // pred_check
      _
    $region27: #{tpu_custom_call.1} parent=1 // pred_check_branch
      %53 = sbr.rel (0) target = $region29
    $region28: #{tpu_custom_call.1} parent=1 // pred_region
      %54 = dma.done [#allocation7], 1024
    $region29: #{tpu_custom_call.1} parent=1 // pred_fallthru
      _
    %p56 = scmp.eq.s32.totalorder 0, 0
    // Predicated region
    $region30: #{tpu_custom_call.1} parent=1 // pred_check
      %p57 = pneg %p56
    $region31: #{tpu_custom_call.1} parent=1 // pred_check_branch
      %59 = sbr.rel (%p57) target = $region33
    $region32: #{tpu_custom_call.1} parent=1 // pred_region
      %60 = vst [vmem:[#allocation2] sm:$0xff] 0.0
    $region33: #{tpu_custom_call.1} parent=1 // pred_fallthru
      _
    %v61 = vld [vmem:[#allocation3] sm:$0xff]
    %v62 = vpack.c.bf16 %v61, %v61
    %v63 = vld [vmem:[#allocation6] sm:$0xf]
    %v64 = vld [vmem:[#allocation2] sm:$0xff]
    %vm65 = vcmask 64512
    %v67 = vsel %vm65, %v62, 0
    %vm69 = vcmask 1043456
    %v71 = vsel %vm69, %v63, 0
    %73 = vmatprep.subr.bf16.mxu0 0
    %74 = vmatpush1.bf16.msra.mxu0 %v71
    %75 = vmatprep.subr.bf16.mxu0 0
    %76 = vmatpush1.bf16.msra.mxu0 0
    %77 = vmatprep.subr.bf16.mxu0 0
    %78 = vmatpush1.bf16.msra.mxu0 0
    %79 = vmatprep.subr.bf16.mxu0 0
    %80 = vmatpush1.bf16.msra.mxu0 0
    %81 = vmatprep.subr.bf16.mxu0 0
    %82 = vmatpush1.bf16.msra.mxu0 0
    %83 = vmatprep.subr.bf16.mxu0 0
    %84 = vmatpush1.bf16.msra.mxu0 0
    %85 = vmatprep.subr.bf16.mxu0 0
    %86 = vmatpush1.bf16.msra.mxu0 0
    %87 = vmatprep.subr.bf16.mxu0 0
    %88 = vmatpush1.bf16.msra.mxu0 0
    %89 = vmatprep.subr.bf16.mxu0 0
    %90 = vmatpush1.bf16.msra.mxu0 0
    %91 = vmatprep.subr.bf16.mxu0 0
    %92 = vmatpush1.bf16.msra.mxu0 0
    %93 = vmatprep.subr.bf16.mxu0 0
    %94 = vmatpush1.bf16.msra.mxu0 0
    %95 = vmatprep.subr.bf16.mxu0 0
    %96 = vmatpush1.bf16.msra.mxu0 0
    %97 = vmatprep.subr.bf16.mxu0 0
    %98 = vmatpush1.bf16.msra.mxu0 0
    %99 = vmatprep.subr.bf16.mxu0 0
    %100 = vmatpush1.bf16.msra.mxu0 0
    %101 = vmatprep.subr.bf16.mxu0 0
    %102 = vmatpush1.bf16.msra.mxu0 0
    %103 = vmatprep.subr.bf16.mxu0 0
    %104 = vmatpush1.bf16.msra.mxu0 0
    %105 = vmatprep.mubr.bf16.mxu0 0
    %106 = vmatmul.mubr.bf16.gmra.mrb[0].mxu0 %v67
    %v107 = vpop.f32.mrb[0].mxu0
    %v108 = vadd.f32 0.0, %v107
    %v109 = vpop.f32.mrb[0].mxu0
    %v110 = vpop.f32.mrb[0].mxu0
    %v111 = vpop.f32.mrb[0].mxu0
    %112 = vdwg.mxu0
    %v113 = vadd.f32 %v64, %v108
    %114 = vst [vmem:[#allocation2] sm:$0xff] %v113
    // Predicated region
    $region34: #{tpu_custom_call.1} parent=1 // pred_check
      %p115 = pneg %p56
    $region35: #{tpu_custom_call.1} parent=1 // pred_check_branch
      %117 = sbr.rel (%p115) target = $region37
    $region36: #{tpu_custom_call.1} parent=1 // pred_region
      %v118 = vld [vmem:[#allocation2] sm:$0xff]
      %v119 = vpack.c.bf16 %v118, %v118
      %v120 = vld [vmem:[#allocation8] sm:$0xf]
      %v121 = vld [vmem:[#allocation8 + $0x4] sm:$0xf]
      %v122 = vld [vmem:[#allocation8 + $0x8] sm:$0xf]
      %v123 = vld [vmem:[#allocation8 + $0xc] sm:$0xf]
      %v124 = vld [vmem:[#allocation8 + $0x10] sm:$0xf]
      %v125 = vld [vmem:[#allocation8 + $0x14] sm:$0xf]
      %v126 = vld [vmem:[#allocation8 + $0x18] sm:$0xf]
      %v127 = vld [vmem:[#allocation8 + $0x1c] sm:$0xf]
      %v128 = vld [vmem:[#allocation8 + $0x20] sm:$0xf]
      %v129 = vld [vmem:[#allocation8 + $0x24] sm:$0xf]
      %v130 = vld [vmem:[#allocation8 + $0x28] sm:$0xf]
      %v131 = vld [vmem:[#allocation8 + $0x2c] sm:$0xf]
      %v132 = vld [vmem:[#allocation8 + $0x30] sm:$0xf]
      %v133 = vld [vmem:[#allocation8 + $0x34] sm:$0xf]
      %v134 = vld [vmem:[#allocation8 + $0x38] sm:$0xf]
      %v135 = vld [vmem:[#allocation8 + $0x3c] sm:$0xf]
      %v136 = vld [vmem:[%s3] sm:$0x1]
      %v138 = vlaneseq
      %v139 = vshrl.u32 %v138, 7
      %v140 = vsub.s32 0, %v139
      %v141 = vrot.slane %v136, %v140
      %v159 = vunpack.c.l.b16 %v120
      %v160 = vunpack.c.l.b16 %v121
      %v161 = vunpack.c.l.b16 %v122
      %v162 = vunpack.c.l.b16 %v123
      %v163 = vunpack.c.l.b16 %v124
      %v164 = vunpack.c.l.b16 %v125
      %v165 = vunpack.c.l.b16 %v126
      %v166 = vunpack.c.l.b16 %v127
      %v167 = vunpack.c.l.b16 %v128
      %v168 = vunpack.c.l.b16 %v129
      %v169 = vunpack.c.l.b16 %v130
      %v170 = vunpack.c.l.b16 %v131
      %v171 = vunpack.c.l.b16 %v132
      %v172 = vunpack.c.l.b16 %v133
      %v173 = vunpack.c.l.b16 %v134
      %v174 = vunpack.c.l.b16 %v135
      %v175 = vpack.c.b16 %v160, %v159
      %v176 = vpack.c.b16 %v162, %v161
      %v177 = vpack.c.b16 %v164, %v163
      %v178 = vpack.c.b16 %v166, %v165
      %v179 = vpack.c.b16 %v168, %v167
      %v180 = vpack.c.b16 %v170, %v169
      %v181 = vpack.c.b16 %v172, %v171
      %v182 = vpack.c.b16 %v174, %v173
      %191 = vmatprep.subr.bf16.mxu0 0
      %192 = vmatpush1.bf16.msra.mxu0 %v175
      %193 = vmatprep.subr.bf16.mxu0 0
      %194 = vmatpush1.bf16.msra.mxu0 %v176
      %195 = vmatprep.subr.bf16.mxu0 0
      %196 = vmatpush1.bf16.msra.mxu0 %v177
      %197 = vmatprep.subr.bf16.mxu0 0
      %198 = vmatpush1.bf16.msra.mxu0 %v178
      %199 = vmatprep.subr.bf16.mxu0 0
      %200 = vmatpush1.bf16.msra.mxu0 %v179
      %201 = vmatprep.subr.bf16.mxu0 0
      %202 = vmatpush1.bf16.msra.mxu0 %v180
      %203 = vmatprep.subr.bf16.mxu0 0
      %204 = vmatpush1.bf16.msra.mxu0 %v181
      %205 = vmatprep.subr.bf16.mxu0 0
      %206 = vmatpush1.bf16.msra.mxu0 %v182
      %207 = vmatprep.subr.bf16.mxu0 0
      %208 = vmatpush1.bf16.msra.mxu0 0
      %209 = vmatprep.subr.bf16.mxu0 0
      %210 = vmatpush1.bf16.msra.mxu0 0
      %211 = vmatprep.subr.bf16.mxu0 0
      %212 = vmatpush1.bf16.msra.mxu0 0
      %213 = vmatprep.subr.bf16.mxu0 0
      %214 = vmatpush1.bf16.msra.mxu0 0
      %215 = vmatprep.subr.bf16.mxu0 0
      %216 = vmatpush1.bf16.msra.mxu0 0
      %217 = vmatprep.subr.bf16.mxu0 0
      %218 = vmatpush1.bf16.msra.mxu0 0
      %219 = vmatprep.subr.bf16.mxu0 0
      %220 = vmatpush1.bf16.msra.mxu0 0
      %221 = vmatprep.subr.bf16.mxu0 0
      %222 = vmatpush1.bf16.msra.mxu0 0
      %223 = vmatprep.mubr.bf16.mxu0 0
      %224 = vmatmul.mubr.bf16.gmra.mrb[0].mxu0 %v119
      %v225 = vpop.f32.mrb[0].mxu0
      %v226 = vadd.f32 %v141, %v225
      %v227 = vpop.f32.mrb[0].mxu0
      %v228 = vpop.f32.mrb[0].mxu0
      %v229 = vpop.f32.mrb[0].mxu0
      %230 = vdwg.mxu0
      %231 = vst [vmem:[#allocation9] sm:$0xff] %v226
    $region37: #{tpu_custom_call.1} parent=1 // pred_fallthru
      _
    // Predicated region
    $region38: #{tpu_custom_call.1} parent=1 // pred_check
      _
    $region39: #{tpu_custom_call.1} parent=1 // pred_check_branch
      %233 = sbr.rel (0) target = $region41
    $region40: #{tpu_custom_call.1} parent=1 // pred_region
      %s235 = ssub.s32 128, 128
      %236 = vsyncadd [#allocation5], %s235
      %s238 = sshll.u32 [#allocation9], 4
      %s239 = int_to_ptr.vmem [resolvable:$true] %s238
      %241 = dma.vmem_to_hbm [thread:$0]  %s239, 128, %s4, [#allocation5]
    $region41: #{tpu_custom_call.1} parent=1 // pred_fallthru
      _
    // Predicated region
    $region42: #{tpu_custom_call.1} parent=1 // pred_check
      _
    $region43: #{tpu_custom_call.1} parent=1 // pred_check_branch
      %243 = sbr.rel (0) target = $region45
    $region44: #{tpu_custom_call.1} parent=1 // pred_region
      %244 = dma.done [#allocation5], 128
    $region45: #{tpu_custom_call.1} parent=1 // pred_fallthru
      _
    %245 = vsyncpa [#allocation4], 1
    %246 = vsyncpa [#allocation7], 1
    %247 = vsyncpa [#allocation5], 1

</llo_original>
